<compile_context>
chip_gen: v6e
topology: v6e:2x2x1
jax: 0.10.0
libtpu: 0.0.40
codegen_flags: <defaults>
</compile_context>

<pallas_src>
import functools

import jax
import jax.numpy as jnp
from jax.experimental import pallas as pl
from jax.experimental.pallas import tpu as pltpu

TARGET_BLOCK_BYTES = 3 << 19  # ~1.5 MiB/block: measured ~85%+ of HBM roofline
TINY_BYTES = 1 << 20          # below this, XLA's native slice beats a kernel launch


def _dma_copy_kernel(dim, table_ref, out_ref, sem):
    # table_ref: (num_emb, E) in HBM (pl.ANY); out_ref: (1, dim, E) in HBM.
    # Single contiguous HBM->HBM DMA of the first `dim` rows.
    cp = pltpu.make_async_copy(table_ref.at[pl.ds(0, dim)], out_ref.at[0], sem)
    cp.start()
    cp.wait()


def _tiled_copy_kernel(table_ref, out_ref):
    # table_ref: VMEM (row_tile, E); out_ref: VMEM (row_tile, E) (leading 1 squeezed).
    # Fused-ready form: downstream elementwise compute / dtype cast rides the
    # otherwise-idle VPU slots of this bandwidth-bound copy.
    out_ref[...] = table_ref[...].astype(out_ref.dtype)


def _choose_row_tile(dim, embed_size, itemsize):
    """Byte-targeted, sublane-aligned row tile with >=2 blocks when possible."""
    dim_rounded = pl.cdiv(dim, 8) * 8
    rows_by_bytes = (TARGET_BLOCK_BYTES // (embed_size * itemsize)) // 8 * 8
    tile = max(8, min(rows_by_bytes, dim_rounded))
    if dim_rounded >= 16:
        # v7x megacore: keep at least 2 grid iterations so both TCs stream.
        half = pl.cdiv(pl.cdiv(dim, 2), 8) * 8
        tile = min(tile, max(8, half))
    return tile


def positional_embedding_forward(table, dim, *, out_dtype=None, fused=False,
                                 force_kernel=False):
    """Pallas equivalent of PositionalEmbedding.forward(dim).

    table: (num_embeddings, embed_size) embedding weight.
    dim  : static python int, number of positions to emit (dim <= num_embeddings).
    out_dtype: optional output dtype (e.g. bf16) -- cast happens at the store.
    fused: force the tiled (fusion-ready) path instead of the direct DMA.
    returns (1, dim, embed_size).
    """
    num_emb, embed_size = table.shape
    # nn.Embedding would raise on out-of-range indices; mirror with static check.
    assert 0 < dim <= num_emb, f"dim={dim} exceeds table rows={num_emb}"
    out_dtype = table.dtype if out_dtype is None else jnp.dtype(out_dtype)
    in_itemsize = jnp.dtype(table.dtype).itemsize
    out_itemsize = jnp.dtype(out_dtype).itemsize

    # Tiny path: kernel launch + pipeline prologue dominate; plain slice wins.
    if not force_kernel and dim * embed_size * in_itemsize < TINY_BYTES:
        return table[:dim].astype(out_dtype)[None]

    cost = pl.CostEstimate(
        flops=0,
        transcendentals=0,
        bytes_accessed=dim * embed_size * (in_itemsize + out_itemsize),
    )

    if not fused and out_dtype == table.dtype:
        # Standalone path: one direct HBM->HBM DMA, zero VMEM footprint.
        return pl.pallas_call(
            functools.partial(_dma_copy_kernel, dim),
            out_shape=jax.ShapeDtypeStruct((1, dim, embed_size), table.dtype),
            in_specs=[pl.BlockSpec(memory_space=pl.ANY)],
            out_specs=pl.BlockSpec(memory_space=pl.ANY),
            scratch_shapes=[pltpu.SemaphoreType.DMA],
            cost_estimate=cost,
        )(table)

    # Fused-ready tiled streaming copy.
    row_tile = _choose_row_tile(dim, embed_size, in_itemsize)
    block_bytes = row_tile * embed_size * max(in_itemsize, out_itemsize)
    # Double-buffered input + output => 4 live blocks; add headroom.  Explicit
    # limit keeps the pipeline double-buffered within v5e's 16 MiB / v7x's
    # 32 MiB default scoped-VMEM limits (and 64 MiB physical on v7x).
    vmem_limit = int(max(4 * block_bytes + (1 << 20), 8 << 20))
    grid = (pl.cdiv(dim, row_tile),)

    return pl.pallas_call(
        _tiled_copy_kernel,
        out_shape=jax.ShapeDtypeStruct((1, dim, embed_size), out_dtype),
        grid=grid,
        in_specs=[pl.BlockSpec((row_tile, embed_size), lambda i: (i, 0))],
        out_specs=pl.BlockSpec((pl.Squeezed(), row_tile, embed_size),
                               lambda i: (0, i, 0)),
        compiler_params=pltpu.CompilerParams(
            dimension_semantics=("parallel",),  # shard row tiles across v7x's 2 TCs
            vmem_limit_bytes=vmem_limit,
        ),
        cost_estimate=cost,
    )(table)


if __name__ == "__main__":
    # Module defaults: embed_size=512, dim=125+1 embeddings.
    embed_size = 512
    num_embeddings = 125 + 1

    # Deterministic "nn.Embedding" weight init (torch default is N(0, 1)).
    key = jax.random.PRNGKey(0)
    table = jax.random.normal(key, (num_embeddings, embed_size), dtype=jnp.float32)

    # Case 1: standalone path -- single HBM->HBM DMA kernel, full table.
    dim1 = num_embeddings
    out1 = jax.block_until_ready(
        positional_embedding_forward(table, dim1, force_kernel=True))
    assert out1.shape == (1, dim1, embed_size), out1.shape
    assert out1.dtype == jnp.float32
    assert jnp.array_equal(out1, table[:dim1][None]), "DMA path mismatch"

    # Case 2: fused-ready tiled path -- dim=125 exercises the partial last
    # block (masked store) and the >=2-block megacore split.
    dim2 = 125
    out2 = jax.block_until_ready(
        positional_embedding_forward(table, dim2, fused=True, force_kernel=True))
    assert out2.shape == (1, dim2, embed_size), out2.shape
    assert out2.dtype == jnp.float32
    assert jnp.array_equal(out2, table[:dim2][None]), "tiled path mismatch"

    # Case 3: tiny-dim short-circuit (plain XLA slice, no kernel launch).
    dim3 = 8
    out3 = jax.block_until_ready(positional_embedding_forward(table, dim3))
    assert out3.shape == (1, dim3, embed_size), out3.shape
    assert jnp.array_equal(out3, table[:dim3][None]), "slice path mismatch"

    print("KERNEL_OK")
</pallas_src>

<mosaic_0001>
module attributes {stable_mosaic.version = 11 : i64} {
  func.func @_dma_copy_kernel(%arg0: memref<126x512xf32, #tpu.memory_space<any>>, %arg1: memref<1x126x512xf32, #tpu.memory_space<any>>, %arg2: memref<!tpu.dma_semaphore, #tpu.memory_space<semaphore_mem>>) attributes {dimension_semantics = [], scalar_prefetch = 0 : i64, scratch_operands = 1 : i64, tpu.core_type = #tpu.core_type<tc>} {
    %c0_i32 = arith.constant 0 : i32
    %c0_i32_0 = arith.constant 0 : i32
    %c0_i32_1 = arith.constant 0 : i32
    %0 = tpu.memref_slice %arg0[%c0_i32_0, %c0_i32_1] : memref<126x512xf32, #tpu.memory_space<any>> -> memref<126x512xf32, #tpu.memory_space<any>>
    %c0_i32_2 = arith.constant 0 : i32
    %c0_i32_3 = arith.constant 0 : i32
    %1 = tpu.memref_slice %arg1[%c0_i32, %c0_i32_2, %c0_i32_3] : memref<1x126x512xf32, #tpu.memory_space<any>> -> memref<1x126x512xf32, #tpu.memory_space<any>>
    %2 = tpu.memref_squeeze %1 : memref<1x126x512xf32, #tpu.memory_space<any>> -> memref<126x512xf32, #tpu.memory_space<any>>
    tpu.enqueue_dma source(%0 : memref<126x512xf32, #tpu.memory_space<any>>) target(%2 : memref<126x512xf32, #tpu.memory_space<any>>) target_semaphore(%arg2 : memref<!tpu.dma_semaphore, #tpu.memory_space<semaphore_mem>>)
    %c0_i32_4 = arith.constant 0 : i32
    %c0_i32_5 = arith.constant 0 : i32
    %c0_i32_6 = arith.constant 0 : i32
    %3 = tpu.memref_slice %arg0[%c0_i32_5, %c0_i32_6] : memref<126x512xf32, #tpu.memory_space<any>> -> memref<126x512xf32, #tpu.memory_space<any>>
    %c0_i32_7 = arith.constant 0 : i32
    %c0_i32_8 = arith.constant 0 : i32
    %4 = tpu.memref_slice %arg1[%c0_i32_4, %c0_i32_7, %c0_i32_8] : memref<1x126x512xf32, #tpu.memory_space<any>> -> memref<1x126x512xf32, #tpu.memory_space<any>>
    %5 = tpu.memref_squeeze %4 : memref<1x126x512xf32, #tpu.memory_space<any>> -> memref<126x512xf32, #tpu.memory_space<any>>
    tpu.wait_dma2 semaphore(%arg2 : memref<!tpu.dma_semaphore, #tpu.memory_space<semaphore_mem>>) src(%3 : memref<126x512xf32, #tpu.memory_space<any>>) dst(%5 : memref<126x512xf32, #tpu.memory_space<any>>)
    return
  }
}

</mosaic_0001>

<llo_original>
// kernel: tpu_custom_call.1
$region0: #{tpu_custom_call.1}
  #allocation0 [shape = 'u32[]', space=smem, size = 0x4, offset = 0x4, fixed_abs, tag = 'smem constant byte address 0x4 - core index']
  #allocation1 [shape = 'u32[144,128]{1,0:T(1,128)}', space=vmem, size = 0x12000, scoped, tag = 'internal scratch']
  #allocation2 [shape = 's32[1]{0}', space=sflag, size = 0x4, scoped, tag = 'scratch operand']
  #allocation3 [shape = 's32[]', space=sflag, size = 0x4, offset = 0, fixed_abs, tag = 'sflag constant byte address 0x0 - dummy sync flag']
  #allocation4 [shape = 's32[]', space=sflag, size = 0x4, offset = 0, fixed_abs, tag = 'sflag constant byte address 0x0 - dummy sync flag']
  #allocation5 [shape = 'u32[]', space=smem, size = 0x4, offset = 0x44, fixed_abs, tag = 'smem constant byte address 0x44 - assertion arg 0']
  #allocation6 [shape = 'u32[]', space=smem, size = 0x4, offset = 0x48, fixed_abs, tag = 'smem constant byte address 0x48 - assertion arg 1']
  %s0 = inlined_call_operand.hbm [shape: f32[126,512], index: 0, kind: input, shape index: {}]
  %s1 = inlined_call_operand.vmem [shape: f32[1,126,512], index: 1, kind: output, shape index: {}]
  %s2 = sld [smem:[#allocation0]]
  $region6: #{tpu_custom_call.1} parent=0
    _
  %s4 = ssub.s32 1, %s2
  %s5 = scalar_select 0, %s4, %s2
  // Predicated region
  $region2: #{tpu_custom_call.1} parent=0 // pred_check
    _
  $region3: #{tpu_custom_call.1} parent=0 // pred_check_branch
    %7 = sbr.rel target = $region5
  $region4: #{tpu_custom_call.1} parent=0 // pred_region
    %8 = sst [smem:[#allocation5]] [#allocation4]
    %9 = sst [smem:[#allocation6]] [#allocation3]
  $region5: #{tpu_custom_call.1} parent=0 // pred_fallthru
    _
  %11 = shalt.err (0)
  %s13 = sshll.u32 %s1, 4
  %s14 = int_to_ptr.vmem [resolvable:$true] %s13
  %16 = dma.hbm_to_vmem [thread:$0]  %s0, 8192, %s14, [#allocation2]
  %s17 = smul.u32 8, 16
  %s18 = smul.u32 %s17, 4
  %s19 = sshll.u32 %s18, 4
  %20 = dma.done [#allocation2], %s19
  %21 = vsyncmov [#allocation2]
  %s22 = vpop.sfrf %21
  %p23 = scmp.eq.s32.totalorder %s22, 0
  %p24 = pneg %p23
  %26 = shalt.err (%p24)

</llo_original>
